<compile_context>
chip_gen: v6e
topology: v6e:2x2x1
jax: 0.10.0
libtpu: 0.0.40
codegen_flags: <defaults>
</compile_context>

<pallas_src>
import jax
import jax.numpy as jnp
from jax.experimental import pallas as pl
from jax.experimental.pallas import tpu as pltpu


def rnn_recurrence_kernel(xproj_ref, h0_ref, whh_ref, wfc_ref, bfc_ref,
                          out_ref, hidden_ref):
    """Single-invocation recurrence.

    xproj_ref : (T, B, H)  precomputed x @ W_ih^T + b_ih + b_hh
    h0_ref    : (B, H)     initial hidden state
    whh_ref   : (H, H)     W_hh^T (pre-transposed: h @ whh)
    wfc_ref   : (H, O)     fc.weight^T
    bfc_ref   : (1, O)     fc.bias
    out_ref   : (B, O)     fc(last hidden)
    hidden_ref: (B, H)     final hidden state
    """
    T = xproj_ref.shape[0]

    # Loop-invariant weight: load once, keep in vregs across the recurrence.
    w_hh = whh_ref[...]

    def step(t, h):
        # h_t = tanh(xproj_t + h_{t-1} @ W_hh^T)  -- one MXU push per step.
        pre = xproj_ref[t] + jnp.dot(h, w_hh,
                                     preferred_element_type=jnp.float32)
        return jnp.tanh(pre)

    h_final = jax.lax.fori_loop(0, T, step, h0_ref[...], unroll=True)

    hidden_ref[...] = h_final
    out_ref[...] = (jnp.dot(h_final, wfc_ref[...],
                            preferred_element_type=jnp.float32)
                    + bfc_ref[...])


def rnn_forward(x, h0, w_ih_t, w_hh_t, b_sum, w_fc_t, b_fc):
    """x: (B, T, I); h0: (num_layers=1, B, H). Returns (out (B,O), hidden (1,B,H))."""
    B, T, I = x.shape
    H = w_hh_t.shape[0]
    O = w_fc_t.shape[1]

    # Time-parallel input projection: one (B*T, I) @ (I, H) matmul with both
    # RNN biases folded in; laid out (T, B, H) so timestep t is a contiguous
    # (B, H) slab inside the kernel.
    xproj = (x.reshape(B * T, I) @ w_ih_t + b_sum).reshape(B, T, H)
    xproj = jnp.swapaxes(xproj, 0, 1)  # (T, B, H)

    vmem = pltpu.MemorySpace.VMEM
    out, hidden = pl.pallas_call(
        rnn_recurrence_kernel,
        out_shape=(jax.ShapeDtypeStruct((B, O), jnp.float32),
                   jax.ShapeDtypeStruct((B, H), jnp.float32)),
        in_specs=[pl.BlockSpec(memory_space=vmem)] * 5,
        out_specs=(pl.BlockSpec(memory_space=vmem),
                   pl.BlockSpec(memory_space=vmem)),
    )(xproj, h0[0], w_hh_t, w_fc_t, b_fc)

    return out, hidden[None]  # hidden -> (num_layers=1, B, H)


def rnn_reference(x, h0, w_ih_t, w_hh_t, b_sum, w_fc_t, b_fc):
    """Pure-JAX reference of the same forward pass (lax.scan over time)."""
    def step(h, x_t):
        h_new = jnp.tanh(x_t @ w_ih_t + h @ w_hh_t + b_sum)
        return h_new, None

    h_final, _ = jax.lax.scan(step, h0[0], jnp.swapaxes(x, 0, 1))
    out = h_final @ w_fc_t + b_fc
    return out, h_final[None]


if __name__ == "__main__":
    # Small shapes consistent with the module's forward.
    B, T, I, H, O = 8, 8, 16, 32, 1
    num_layers = 1

    key = jax.random.PRNGKey(0)
    kx, kh, k1, k2, k3, k4, k5, k6 = jax.random.split(key, 8)

    x = jax.random.normal(kx, (B, T, I), dtype=jnp.float32)
    # nn.RNN's init_hidden draws torch.randn; we draw a deterministic normal h0.
    h0 = jax.random.normal(kh, (num_layers, B, H), dtype=jnp.float32)

    # Deterministic parameter init (PyTorch-style uniform(-1/sqrt(H), 1/sqrt(H))).
    bound = 1.0 / jnp.sqrt(jnp.float32(H))
    w_ih = jax.random.uniform(k1, (H, I), minval=-bound, maxval=bound)  # torch weight_ih_l0
    w_hh = jax.random.uniform(k2, (H, H), minval=-bound, maxval=bound)  # torch weight_hh_l0
    b_ih = jax.random.uniform(k3, (H,), minval=-bound, maxval=bound)
    b_hh = jax.random.uniform(k4, (H,), minval=-bound, maxval=bound)
    w_fc = jax.random.uniform(k5, (O, H), minval=-bound, maxval=bound)  # torch fc.weight
    b_fc = jax.random.uniform(k6, (O,), minval=-bound, maxval=bound)

    # Pre-transpose weights so everything is row-major x @ W; fold RNN biases.
    w_ih_t = w_ih.T                     # (I, H)
    w_hh_t = w_hh.T                     # (H, H)
    b_sum = (b_ih + b_hh)[None, :]      # (1, H)
    w_fc_t = w_fc.T                     # (H, O)
    b_fc2 = b_fc[None, :]               # (1, O)

    out, hidden = rnn_forward(x, h0, w_ih_t, w_hh_t, b_sum, w_fc_t, b_fc2)
    out = jax.block_until_ready(out)
    hidden = jax.block_until_ready(hidden)

    out_ref, hidden_ref = rnn_reference(x, h0, w_ih_t, w_hh_t, b_sum, w_fc_t, b_fc2)
    assert out.shape == (B, O)
    assert hidden.shape == (num_layers, B, H)
    assert jnp.allclose(out, out_ref, atol=1e-5, rtol=1e-5)
    assert jnp.allclose(hidden, hidden_ref, atol=1e-5, rtol=1e-5)

    print("KERNEL_OK")
</pallas_src>

<mosaic_0001>
module attributes {stable_mosaic.version = 11 : i64} {
  func.func @rnn_recurrence_kernel(%arg0: memref<8x8x32xf32, #tpu.memory_space<vmem>>, %arg1: memref<8x32xf32, #tpu.memory_space<vmem>>, %arg2: memref<32x32xf32, #tpu.memory_space<vmem>>, %arg3: memref<32x1xf32, #tpu.memory_space<vmem>>, %arg4: memref<1x1xf32, #tpu.memory_space<vmem>>, %arg5: memref<8x1xf32, #tpu.memory_space<vmem>>, %arg6: memref<8x32xf32, #tpu.memory_space<vmem>>) attributes {dimension_semantics = [], scalar_prefetch = 0 : i64, scratch_operands = 0 : i64, tpu.core_type = #tpu.core_type<tc>} {
    %c0 = arith.constant 0 : index
    %c0_0 = arith.constant 0 : index
    %0 = vector.load %arg2[%c0, %c0_0] : memref<32x32xf32, #tpu.memory_space<vmem>>, vector<32x32xf32>
    %c0_1 = arith.constant 0 : index
    %c0_2 = arith.constant 0 : index
    %1 = vector.load %arg1[%c0_1, %c0_2] : memref<8x32xf32, #tpu.memory_space<vmem>>, vector<8x32xf32>
    %c0_i32 = arith.constant 0 : i32
    %2 = arith.index_cast %c0_i32 : i32 to index
    %c0_3 = arith.constant 0 : index
    %c0_4 = arith.constant 0 : index
    %3 = vector.load %arg0[%2, %c0_3, %c0_4] : memref<8x8x32xf32, #tpu.memory_space<vmem>>, vector<1x8x32xf32>
    %4 = vector.shape_cast %3 : vector<1x8x32xf32> to vector<8x32xf32>
    %cst = arith.constant dense<0.000000e+00> : vector<8x32xf32>
    %5 = tpu.matmul %1, %0, %cst {dimension_numbers = #tpu.dot_dimension_numbers<[1], [0], [0], [1], [0, 0, 1, 1], [], []>} : vector<8x32xf32>, vector<32x32xf32>, vector<8x32xf32> -> vector<8x32xf32>
    %6 = arith.addf %4, %5 : vector<8x32xf32>
    %7 = math.tanh %6 : vector<8x32xf32>
    %c1_i32 = arith.constant 1 : i32
    %8 = arith.index_cast %c1_i32 : i32 to index
    %c0_5 = arith.constant 0 : index
    %c0_6 = arith.constant 0 : index
    %9 = vector.load %arg0[%8, %c0_5, %c0_6] : memref<8x8x32xf32, #tpu.memory_space<vmem>>, vector<1x8x32xf32>
    %10 = vector.shape_cast %9 : vector<1x8x32xf32> to vector<8x32xf32>
    %cst_7 = arith.constant dense<0.000000e+00> : vector<8x32xf32>
    %11 = tpu.matmul %7, %0, %cst_7 {dimension_numbers = #tpu.dot_dimension_numbers<[1], [0], [0], [1], [0, 0, 1, 1], [], []>} : vector<8x32xf32>, vector<32x32xf32>, vector<8x32xf32> -> vector<8x32xf32>
    %12 = arith.addf %10, %11 : vector<8x32xf32>
    %13 = math.tanh %12 : vector<8x32xf32>
    %c2_i32 = arith.constant 2 : i32
    %14 = arith.index_cast %c2_i32 : i32 to index
    %c0_8 = arith.constant 0 : index
    %c0_9 = arith.constant 0 : index
    %15 = vector.load %arg0[%14, %c0_8, %c0_9] : memref<8x8x32xf32, #tpu.memory_space<vmem>>, vector<1x8x32xf32>
    %16 = vector.shape_cast %15 : vector<1x8x32xf32> to vector<8x32xf32>
    %cst_10 = arith.constant dense<0.000000e+00> : vector<8x32xf32>
    %17 = tpu.matmul %13, %0, %cst_10 {dimension_numbers = #tpu.dot_dimension_numbers<[1], [0], [0], [1], [0, 0, 1, 1], [], []>} : vector<8x32xf32>, vector<32x32xf32>, vector<8x32xf32> -> vector<8x32xf32>
    %18 = arith.addf %16, %17 : vector<8x32xf32>
    %19 = math.tanh %18 : vector<8x32xf32>
    %c3_i32 = arith.constant 3 : i32
    %20 = arith.index_cast %c3_i32 : i32 to index
    %c0_11 = arith.constant 0 : index
    %c0_12 = arith.constant 0 : index
    %21 = vector.load %arg0[%20, %c0_11, %c0_12] : memref<8x8x32xf32, #tpu.memory_space<vmem>>, vector<1x8x32xf32>
    %22 = vector.shape_cast %21 : vector<1x8x32xf32> to vector<8x32xf32>
    %cst_13 = arith.constant dense<0.000000e+00> : vector<8x32xf32>
    %23 = tpu.matmul %19, %0, %cst_13 {dimension_numbers = #tpu.dot_dimension_numbers<[1], [0], [0], [1], [0, 0, 1, 1], [], []>} : vector<8x32xf32>, vector<32x32xf32>, vector<8x32xf32> -> vector<8x32xf32>
    %24 = arith.addf %22, %23 : vector<8x32xf32>
    %25 = math.tanh %24 : vector<8x32xf32>
    %c4_i32 = arith.constant 4 : i32
    %26 = arith.index_cast %c4_i32 : i32 to index
    %c0_14 = arith.constant 0 : index
    %c0_15 = arith.constant 0 : index
    %27 = vector.load %arg0[%26, %c0_14, %c0_15] : memref<8x8x32xf32, #tpu.memory_space<vmem>>, vector<1x8x32xf32>
    %28 = vector.shape_cast %27 : vector<1x8x32xf32> to vector<8x32xf32>
    %cst_16 = arith.constant dense<0.000000e+00> : vector<8x32xf32>
    %29 = tpu.matmul %25, %0, %cst_16 {dimension_numbers = #tpu.dot_dimension_numbers<[1], [0], [0], [1], [0, 0, 1, 1], [], []>} : vector<8x32xf32>, vector<32x32xf32>, vector<8x32xf32> -> vector<8x32xf32>
    %30 = arith.addf %28, %29 : vector<8x32xf32>
    %31 = math.tanh %30 : vector<8x32xf32>
    %c5_i32 = arith.constant 5 : i32
    %32 = arith.index_cast %c5_i32 : i32 to index
    %c0_17 = arith.constant 0 : index
    %c0_18 = arith.constant 0 : index
    %33 = vector.load %arg0[%32, %c0_17, %c0_18] : memref<8x8x32xf32, #tpu.memory_space<vmem>>, vector<1x8x32xf32>
    %34 = vector.shape_cast %33 : vector<1x8x32xf32> to vector<8x32xf32>
    %cst_19 = arith.constant dense<0.000000e+00> : vector<8x32xf32>
    %35 = tpu.matmul %31, %0, %cst_19 {dimension_numbers = #tpu.dot_dimension_numbers<[1], [0], [0], [1], [0, 0, 1, 1], [], []>} : vector<8x32xf32>, vector<32x32xf32>, vector<8x32xf32> -> vector<8x32xf32>
    %36 = arith.addf %34, %35 : vector<8x32xf32>
    %37 = math.tanh %36 : vector<8x32xf32>
    %c6_i32 = arith.constant 6 : i32
    %38 = arith.index_cast %c6_i32 : i32 to index
    %c0_20 = arith.constant 0 : index
    %c0_21 = arith.constant 0 : index
    %39 = vector.load %arg0[%38, %c0_20, %c0_21] : memref<8x8x32xf32, #tpu.memory_space<vmem>>, vector<1x8x32xf32>
    %40 = vector.shape_cast %39 : vector<1x8x32xf32> to vector<8x32xf32>
    %cst_22 = arith.constant dense<0.000000e+00> : vector<8x32xf32>
    %41 = tpu.matmul %37, %0, %cst_22 {dimension_numbers = #tpu.dot_dimension_numbers<[1], [0], [0], [1], [0, 0, 1, 1], [], []>} : vector<8x32xf32>, vector<32x32xf32>, vector<8x32xf32> -> vector<8x32xf32>
    %42 = arith.addf %40, %41 : vector<8x32xf32>
    %43 = math.tanh %42 : vector<8x32xf32>
    %c7_i32 = arith.constant 7 : i32
    %44 = arith.index_cast %c7_i32 : i32 to index
    %c0_23 = arith.constant 0 : index
    %c0_24 = arith.constant 0 : index
    %45 = vector.load %arg0[%44, %c0_23, %c0_24] : memref<8x8x32xf32, #tpu.memory_space<vmem>>, vector<1x8x32xf32>
    %46 = vector.shape_cast %45 : vector<1x8x32xf32> to vector<8x32xf32>
    %cst_25 = arith.constant dense<0.000000e+00> : vector<8x32xf32>
    %47 = tpu.matmul %43, %0, %cst_25 {dimension_numbers = #tpu.dot_dimension_numbers<[1], [0], [0], [1], [0, 0, 1, 1], [], []>} : vector<8x32xf32>, vector<32x32xf32>, vector<8x32xf32> -> vector<8x32xf32>
    %48 = arith.addf %46, %47 : vector<8x32xf32>
    %49 = math.tanh %48 : vector<8x32xf32>
    %c8_i32 = arith.constant 8 : i32
    %c0_26 = arith.constant 0 : index
    %c0_27 = arith.constant 0 : index
    %50 = vector.load %arg6[%c0_26, %c0_27] : memref<8x32xf32, #tpu.memory_space<vmem>>, vector<8x32xf32>
    tpu.vector_store %arg6[%c0_26, %c0_27], %49 {strides = array<i32>} : memref<8x32xf32, #tpu.memory_space<vmem>>, vector<8x32xf32>,
    %c0_28 = arith.constant 0 : index
    %c0_29 = arith.constant 0 : index
    %51 = vector.load %arg3[%c0_28, %c0_29] : memref<32x1xf32, #tpu.memory_space<vmem>>, vector<32x1xf32>
    %cst_30 = arith.constant dense<0.000000e+00> : vector<8x1xf32>
    %52 = tpu.matmul %49, %51, %cst_30 {dimension_numbers = #tpu.dot_dimension_numbers<[1], [0], [0], [1], [0, 0, 1, 1], [], []>} : vector<8x32xf32>, vector<32x1xf32>, vector<8x1xf32> -> vector<8x1xf32>
    %c0_31 = arith.constant 0 : index
    %c0_32 = arith.constant 0 : index
    %53 = vector.load %arg4[%c0_31, %c0_32] : memref<1x1xf32, #tpu.memory_space<vmem>>, vector<1x1xf32>
    %54 = vector.broadcast %53 : vector<1x1xf32> to vector<8x1xf32>
    %55 = arith.addf %52, %54 : vector<8x1xf32>
    %c0_33 = arith.constant 0 : index
    %c0_34 = arith.constant 0 : index
    %56 = vector.load %arg5[%c0_33, %c0_34] : memref<8x1xf32, #tpu.memory_space<vmem>>, vector<8x1xf32>
    tpu.vector_store %arg5[%c0_33, %c0_34], %55 {strides = array<i32>} : memref<8x1xf32, #tpu.memory_space<vmem>>, vector<8x1xf32>,
    return
  }
}

</mosaic_0001>

<llo_original>
// kernel: tpu_custom_call.1
$region0: #{tpu_custom_call.1}
  #allocation0 [shape = 'u32[]', space=smem, size = 0x4, offset = 0x4, fixed_abs, tag = 'smem constant byte address 0x4 - core index']
  #allocation1 [shape = 'u32[144,128]{1,0:T(1,128)}', space=vmem, size = 0x12000, scoped, tag = 'internal scratch']
  #allocation2 [shape = 'f32[1,1]{1,0:T(1,128)S(1)}', space=vmem, size = 0x200, scoped, tag = 'scoped memory for tpu_custom_call.1']
  %s0 = inlined_call_operand.hbm [shape: f32[8,8,32], index: 0, kind: input, shape index: {}]
  %s1 = inlined_call_operand.hbm [shape: f32[8,32], index: 1, kind: input, shape index: {}]
  %s2 = inlined_call_operand.vmem [shape: f32[32,32], index: 2, kind: input, shape index: {}]
  %s3 = inlined_call_operand.vmem [shape: f32[32,1], index: 3, kind: input, shape index: {}]
  %s4 = inlined_call_operand.<no memory space> [shape: f32[1,1], index: 4, kind: input, shape index: {}]
  %s5 = inlined_call_operand.vmem [shape: f32[8,1], index: 5, kind: output, shape index: {0}]
  %s6 = inlined_call_operand.hbm [shape: f32[8,32], index: 6, kind: output, shape index: {1}]
  %7 = xla_tuple %s5, %s6
  %s8 = sld [smem:[#allocation0]]
  $region46: #{tpu_custom_call.1} parent=0
    _
  %s10 = ssub.s32 1, %s8
  %s11 = scalar_select 0, %s10, %s8
  %v12 = vstv %s4
  %13 = vst [vmem:[#allocation2] sm:$0x1] %v12
  $region1: #{tpu_custom_call.1} parent=0
    #allocation3 [shape = 'u8[32768]{0}', space=vmem, size = 0x8000, scoped, tag = 'input window, operand 0, single buffered']
    #allocation4 [shape = 's32[1]{0}', space=sflag, size = 0x4, scoped, tag = 'scoped memory for tpu_custom_call.1']
    #allocation5 [shape = 's32[1]{0}', space=sflag, size = 0x4, scoped, tag = 'scoped memory for tpu_custom_call.1']
    #allocation6 [shape = 'u8[4096]{0}', space=vmem, size = 0x1000, scoped, tag = 'input window, operand 1, single buffered']
    #allocation7 [shape = 's32[1]{0}', space=sflag, size = 0x4, scoped, tag = 'scoped memory for tpu_custom_call.1']
    #allocation8 [shape = 'u8[4096]{0}', space=vmem, size = 0x1000, scoped, tag = 'output window, operand 1, single buffered']
    %14 = vsyncpa [#allocation4], 0
    %15 = vsyncpa [#allocation7], 0
    %16 = vsyncpa [#allocation5], 0
    // Predicated region
    $region2: #{tpu_custom_call.1} parent=1 // pred_check
      _
    $region3: #{tpu_custom_call.1} parent=1 // pred_check_branch
      %18 = sbr.rel (0) target = $region5
    $region4: #{tpu_custom_call.1} parent=1 // pred_region
      %s20 = ssub.s32 1024, 1024
      %21 = vsyncadd [#allocation4], %s20
      %s22 = sshll.u32 [#allocation3], 4
      %s23 = int_to_ptr.vmem [resolvable:$true] %s22
      %28 = dma.hbm_to_vmem [thread:$0]  %s0, 1024, %s23, [#allocation4], 128, 128, 8
    $region5: #{tpu_custom_call.1} parent=1 // pred_fallthru
      _
    // Predicated region
    $region6: #{tpu_custom_call.1} parent=1 // pred_check
      _
    $region7: #{tpu_custom_call.1} parent=1 // pred_check_branch
      %30 = sbr.rel (0) target = $region9
    $region8: #{tpu_custom_call.1} parent=1 // pred_region
      %s32 = ssub.s32 128, 128
      %33 = vsyncadd [#allocation7], %s32
      %s35 = sshll.u32 [#allocation6], 4
      %s36 = int_to_ptr.vmem [resolvable:$true] %s35
      %38 = dma.hbm_to_vmem [thread:$0]  %s1, 128, %s36, [#allocation7]
    $region9: #{tpu_custom_call.1} parent=1 // pred_fallthru
      _
    // Predicated region
    $region10: #{tpu_custom_call.1} parent=1 // pred_check
      _
    $region11: #{tpu_custom_call.1} parent=1 // pred_check_branch
      %40 = sbr.rel (0) target = $region13
    $region12: #{tpu_custom_call.1} parent=1 // pred_region
      _
    $region13: #{tpu_custom_call.1} parent=1 // pred_fallthru
      _
    // Predicated region
    $region14: #{tpu_custom_call.1} parent=1 // pred_check
      _
    $region15: #{tpu_custom_call.1} parent=1 // pred_check_branch
      %42 = sbr.rel (0) target = $region17
    $region16: #{tpu_custom_call.1} parent=1 // pred_region
      _
    $region17: #{tpu_custom_call.1} parent=1 // pred_fallthru
      _
    // Predicated region
    $region18: #{tpu_custom_call.1} parent=1 // pred_check
      _
    $region19: #{tpu_custom_call.1} parent=1 // pred_check_branch
      %44 = sbr.rel (0) target = $region21
    $region20: #{tpu_custom_call.1} parent=1 // pred_region
      _
    $region21: #{tpu_custom_call.1} parent=1 // pred_fallthru
      _
    // Predicated region
    $region22: #{tpu_custom_call.1} parent=1 // pred_check
      _
    $region23: #{tpu_custom_call.1} parent=1 // pred_check_branch
      %46 = sbr.rel (0) target = $region25
    $region24: #{tpu_custom_call.1} parent=1 // pred_region
      %47 = dma.done [#allocation4], 1024
    $region25: #{tpu_custom_call.1} parent=1 // pred_fallthru
      _
    // Predicated region
    $region26: #{tpu_custom_call.1} parent=1 // pred_check
      _
    $region27: #{tpu_custom_call.1} parent=1 // pred_check_branch
      %49 = sbr.rel (0) target = $region29
    $region28: #{tpu_custom_call.1} parent=1 // pred_region
      %50 = dma.done [#allocation7], 128
    $region29: #{tpu_custom_call.1} parent=1 // pred_fallthru
      _
    %v51 = vld [vmem:[%s2] sm:$0xff]
    %v52 = vld [vmem:[%s2 + $0x8] sm:$0xff]
    %v53 = vld [vmem:[%s2 + $0x10] sm:$0xff]
    %v54 = vld [vmem:[%s2 + $0x18] sm:$0xff]
    %v55 = vld [vmem:[#allocation6] sm:$0xff]
    %v56 = vld [vmem:[#allocation3] sm:$0xff]
    %vm57 = vcmask 261120
    %v59 = vsel %vm57, %v55, 0
    %61 = vmatprep.subr.mxu0 0.0
    %62 = vmatpush1.msra.mxu0 0.0
    %63 = vmatprep.subr.mxu0 0.0
    %64 = vmatpush1.msra.mxu0 0.0
    %65 = vmatprep.subr.mxu0 0.0
    %66 = vmatpush1.msra.mxu0 0.0
    %67 = vmatprep.subr.mxu0 0.0
    %68 = vmatpush1.msra.mxu0 0.0
    %69 = vmatprep.subr.mxu0 0.0
    %70 = vmatpush1.msra.mxu0 0.0
    %71 = vmatprep.subr.mxu0 0.0
    %72 = vmatpush1.msra.mxu0 0.0
    %73 = vmatprep.subr.mxu0 0.0
    %74 = vmatpush1.msra.mxu0 0.0
    %75 = vmatprep.subr.mxu0 0.0
    %76 = vmatpush1.msra.mxu0 0.0
    %77 = vmatprep.subr.mxu0 0.0
    %78 = vmatpush1.msra.mxu0 0.0
    %79 = vmatprep.subr.mxu0 0.0
    %80 = vmatpush1.msra.mxu0 0.0
    %81 = vmatprep.subr.mxu0 0.0
    %82 = vmatpush1.msra.mxu0 0.0
    %83 = vmatprep.subr.mxu0 0.0
    %84 = vmatpush1.msra.mxu0 0.0
    %85 = vmatprep.subr.mxu0 0.0
    %86 = vmatpush1.msra.mxu0 %v54
    %87 = vmatprep.subr.mxu0 0.0
    %88 = vmatpush1.msra.mxu0 %v53
    %89 = vmatprep.subr.mxu0 0.0
    %90 = vmatpush1.msra.mxu0 %v52
    %91 = vmatprep.subr.mxu0 0.0
    %92 = vmatpush1.msra.mxu0 %v51
    %93 = vmatprep.subr.mxu0 0.0
    %94 = vmatpush2.msra.mxu0 0.0
    %95 = vmatprep.subr.mxu0 0.0
    %96 = vmatpush2.msra.mxu0 0.0
    %97 = vmatprep.subr.mxu0 0.0
    %98 = vmatpush2.msra.mxu0 0.0
    %99 = vmatprep.subr.mxu0 0.0
    %100 = vmatpush2.msra.mxu0 0.0
    %101 = vmatprep.subr.mxu0 0.0
    %102 = vmatpush2.msra.mxu0 0.0
    %103 = vmatprep.subr.mxu0 0.0
    %104 = vmatpush2.msra.mxu0 0.0
    %105 = vmatprep.subr.mxu0 0.0
    %106 = vmatpush2.msra.mxu0 0.0
    %107 = vmatprep.subr.mxu0 0.0
    %108 = vmatpush2.msra.mxu0 0.0
    %109 = vmatprep.subr.mxu0 0.0
    %110 = vmatpush2.msra.mxu0 0.0
    %111 = vmatprep.subr.mxu0 0.0
    %112 = vmatpush2.msra.mxu0 0.0
    %113 = vmatprep.subr.mxu0 0.0
    %114 = vmatpush2.msra.mxu0 0.0
    %115 = vmatprep.subr.mxu0 0.0
    %116 = vmatpush2.msra.mxu0 0.0
    %117 = vmatprep.subr.mxu0 0.0
    %118 = vmatpush2.msra.mxu0 0.0
    %119 = vmatprep.subr.mxu0 0.0
    %120 = vmatpush2.msra.mxu0 0.0
    %121 = vmatprep.subr.mxu0 0.0
    %122 = vmatpush2.msra.mxu0 0.0
    %123 = vmatprep.subr.mxu0 0.0
    %124 = vmatpush2.msra.mxu0 0.0
    %125 = vmatprep.mubr.f32.mxu0 0.0
    %126 = vmatmul.mubr.f32.gmra.mxu0 %v59
    %v127 = vpop.f32.mrf.mxu0
    %v128 = vadd.f32 0.0, %v127
    %v129 = vpop.f32.mrf.mxu0
    %130 = vdwg.mxu0
    %v131 = vadd.f32 %v56, %v128
    %v132 = vtanh.pop %v131
    %s133 = scalar_lea.vmem [#allocation3], 8
    %v134 = vld [vmem:[%s133] sm:$0xff]
    %v136 = vsel %vm57, %v132, 0
    %138 = vmatprep.subr.mxu0 0.0
    %139 = vmatpush1.msra.mxu0 0.0
    %140 = vmatprep.subr.mxu0 0.0
    %141 = vmatpush1.msra.mxu0 0.0
    %142 = vmatprep.subr.mxu0 0.0
    %143 = vmatpush1.msra.mxu0 0.0
    %144 = vmatprep.subr.mxu0 0.0
    %145 = vmatpush1.msra.mxu0 0.0
    %146 = vmatprep.subr.mxu0 0.0
    %147 = vmatpush1.msra.mxu0 0.0
    %148 = vmatprep.subr.mxu0 0.0
    %149 = vmatpush1.msra.mxu0 0.0
    %150 = vmatprep.subr.mxu0 0.0
    %151 = vmatpush1.msra.mxu0 0.0
    %152 = vmatprep.subr.mxu0 0.0
    %153 = vmatpush1.msra.mxu0 0.0
    %154 = vmatprep.subr.mxu0 0.0
    %155 = vmatpush1.msra.mxu0 0.0
    %156 = vmatprep.subr.mxu0 0.0
    %157 = vmatpush1.msra.mxu0 0.0
    %158 = vmatprep.subr.mxu0 0.0
    %159 = vmatpush1.msra.mxu0 0.0
    %160 = vmatprep.subr.mxu0 0.0
    %161 = vmatpush1.msra.mxu0 0.0
    %162 = vmatprep.subr.mxu0 0.0
    %163 = vmatpush1.msra.mxu0 %v54
    %164 = vmatprep.subr.mxu0 0.0
    %165 = vmatpush1.msra.mxu0 %v53
    %166 = vmatprep.subr.mxu0 0.0
    %167 = vmatpush1.msra.mxu0 %v52
    %168 = vmatprep.subr.mxu0 0.0
    %169 = vmatpush1.msra.mxu0 %v51
    %170 = vmatprep.subr.mxu0 0.0
    %171 = vmatpush2.msra.mxu0 0.0
    %172 = vmatprep.subr.mxu0 0.0
    %173 = vmatpush2.msra.mxu0 0.0
    %174 = vmatprep.subr.mxu0 0.0
    %175 = vmatpush2.msra.mxu0 0.0
    %176 = vmatprep.subr.mxu0 0.0
    %177 = vmatpush2.msra.mxu0 0.0
    %178 = vmatprep.subr.mxu0 0.0
    %179 = vmatpush2.msra.mxu0 0.0
    %180 = vmatprep.subr.mxu0 0.0
    %181 = vmatpush2.msra.mxu0 0.0
    %182 = vmatprep.subr.mxu0 0.0
    %183 = vmatpush2.msra.mxu0 0.0
    %184 = vmatprep.subr.mxu0 0.0
    %185 = vmatpush2.msra.mxu0 0.0
    %186 = vmatprep.subr.mxu0 0.0
    %187 = vmatpush2.msra.mxu0 0.0
    %188 = vmatprep.subr.mxu0 0.0
    %189 = vmatpush2.msra.mxu0 0.0
    %190 = vmatprep.subr.mxu0 0.0
    %191 = vmatpush2.msra.mxu0 0.0
    %192 = vmatprep.subr.mxu0 0.0
    %193 = vmatpush2.msra.mxu0 0.0
    %194 = vmatprep.subr.mxu0 0.0
    %195 = vmatpush2.msra.mxu0 0.0
    %196 = vmatprep.subr.mxu0 0.0
    %197 = vmatpush2.msra.mxu0 0.0
    %198 = vmatprep.subr.mxu0 0.0
    %199 = vmatpush2.msra.mxu0 0.0
    %200 = vmatprep.subr.mxu0 0.0
    %201 = vmatpush2.msra.mxu0 0.0
    %202 = vmatprep.mubr.f32.mxu0 0.0
    %203 = vmatmul.mubr.f32.gmra.mxu0 %v136
    %v204 = vpop.f32.mrf.mxu0
    %v205 = vadd.f32 0.0, %v204
    %v206 = vpop.f32.mrf.mxu0
    %207 = vdwg.mxu0
    %v208 = vadd.f32 %v134, %v205
    %v209 = vtanh.pop %v208
    %s210 = scalar_lea.vmem [#allocation3], 16
    %v211 = vld [vmem:[%s210] sm:$0xff]
    %v213 = vsel %vm57, %v209, 0
    %215 = vmatprep.subr.mxu0 0.0
    %216 = vmatpush1.msra.mxu0 0.0
    %217 = vmatprep.subr.mxu0 0.0
    %218 = vmatpush1.msra.mxu0 0.0
    %219 = vmatprep.subr.mxu0 0.0
    %220 = vmatpush1.msra.mxu0 0.0
    %221 = vmatprep.subr.mxu0 0.0
    %222 = vmatpush1.msra.mxu0 0.0
    %223 = vmatprep.subr.mxu0 0.0
    %224 = vmatpush1.msra.mxu0 0.0
    %225 = vmatprep.subr.mxu0 0.0
    %226 = vmatpush1.msra.mxu0 0.0
    %227 = vmatprep.subr.mxu0 0.0
    %228 = vmatpush1.msra.mxu0 0.0
    %229 = vmatprep.subr.mxu0 0.0
    %230 = vmatpush1.msra.mxu0 0.0
    %231 = vmatprep.subr.mxu0 0.0
    %232 = vmatpush1.msra.mxu0 0.0
    %233 = vmatprep.subr.mxu0 0.0
    %234 = vmatpush1.msra.mxu0 0.0
    %235 = vmatprep.subr.mxu0 0.0
    %236 = vmatpush1.msra.mxu0 0.0
    %237 = vmatprep.subr.mxu0 0.0
    %238 = vmatpush1.msra.mxu0 0.0
    %239 = vmatprep.subr.mxu0 0.0
    %240 = vmatpush1.msra.mxu0 %v54
    %241 = vmatprep.subr.mxu0 0.0
    %242 = vmatpush1.msra.mxu0 %v53
    %243 = vmatprep.subr.mxu0 0.0
    %244 = vmatpush1.msra.mxu0 %v52
    %245 = vmatprep.subr.mxu0 0.0
    %246 = vmatpush1.msra.mxu0 %v51
    %247 = vmatprep.subr.mxu0 0.0
    %248 = vmatpush2.msra.mxu0 0.0
    %249 = vmatprep.subr.mxu0 0.0
    %250 = vmatpush2.msra.mxu0 0.0
    %251 = vmatprep.subr.mxu0 0.0
    %252 = vmatpush2.msra.mxu0 0.0
    %253 = vmatprep.subr.mxu0 0.0
    %254 = vmatpush2.msra.mxu0 0.0
    %255 = vmatprep.subr.mxu0 0.0
    %256 = vmatpush2.msra.mxu0 0.0
    %257 = vmatprep.subr.mxu0 0.0
    %258 = vmatpush2.msra.mxu0 0.0
    %259 = vmatprep.subr.mxu0 0.0
    %260 = vmatpush2.msra.mxu0 0.0
    %261 = vmatprep.subr.mxu0 0.0
    %262 = vmatpush2.msra.mxu0 0.0
    %263 = vmatprep.subr.mxu0 0.0
    %264 = vmatpush2.msra.mxu0 0.0
    %265 = vmatprep.subr.mxu0 0.0
    %266 = vmatpush2.msra.mxu0 0.0
    %267 = vmatprep.subr.mxu0 0.0
    %268 = vmatpush2.msra.mxu0 0.0
    %269 = vmatprep.subr.mxu0 0.0
    %270 = vmatpush2.msra.mxu0 0.0
    %271 = vmatprep.subr.mxu0 0.0
    %272 = vmatpush2.msra.mxu0 0.0
    %273 = vmatprep.subr.mxu0 0.0
    %274 = vmatpush2.msra.mxu0 0.0
    %275 = vmatprep.subr.mxu0 0.0
    %276 = vmatpush2.msra.mxu0 0.0
    %277 = vmatprep.subr.mxu0 0.0
    %278 = vmatpush2.msra.mxu0 0.0
    %279 = vmatprep.mubr.f32.mxu0 0.0
    %280 = vmatmul.mubr.f32.gmra.mxu0 %v213
    %v281 = vpop.f32.mrf.mxu0
    %v282 = vadd.f32 0.0, %v281
    %v283 = vpop.f32.mrf.mxu0
    %284 = vdwg.mxu0
    %v285 = vadd.f32 %v211, %v282
    %v286 = vtanh.pop %v285
    %s287 = scalar_lea.vmem [#allocation3], 24
    %v288 = vld [vmem:[%s287] sm:$0xff]
    %v290 = vsel %vm57, %v286, 0
    %292 = vmatprep.subr.mxu0 0.0
    %293 = vmatpush1.msra.mxu0 0.0
    %294 = vmatprep.subr.mxu0 0.0
    %295 = vmatpush1.msra.mxu0 0.0
    %296 = vmatprep.subr.mxu0 0.0
    %297 = vmatpush1.msra.mxu0 0.0
    %298 = vmatprep.subr.mxu0 0.0
    %299 = vmatpush1.msra.mxu0 0.0
    %300 = vmatprep.subr.mxu0 0.0
    %301 = vmatpush1.msra.mxu0 0.0
    %302 = vmatprep.subr.mxu0 0.0
    %303 = vmatpush1.msra.mxu0 0.0
    %304 = vmatprep.subr.mxu0 0.0
    %305 = vmatpush1.msra.mxu0 0.0
    %306 = vmatprep.subr.mxu0 0.0
    %307 = vmatpush1.msra.mxu0 0.0
    %308 = vmatprep.subr.mxu0 0.0
    %309 = vmatpush1.msra.mxu0 0.0
    %310 = vmatprep.subr.mxu0 0.0
    %311 = vmatpush1.msra.mxu0 0.0
    %312 = vmatprep.subr.mxu0 0.0
    %313 = vmatpush1.msra.mxu0 0.0
    %314 = vmatprep.subr.mxu0 0.0
    %315 = vmatpush1.msra.mxu0 0.0
    %316 = vmatprep.subr.mxu0 0.0
    %317 = vmatpush1.msra.mxu0 %v54
    %318 = vmatprep.subr.mxu0 0.0
    %319 = vmatpush1.msra.mxu0 %v53
    %320 = vmatprep.subr.mxu0 0.0
    %321 = vmatpush1.msra.mxu0 %v52
    %322 = vmatprep.subr.mxu0 0.0
    %323 = vmatpush1.msra.mxu0 %v51
    %324 = vmatprep.subr.mxu0 0.0
    %325 = vmatpush2.msra.mxu0 0.0
    %326 = vmatprep.subr.mxu0 0.0
    %327 = vmatpush2.msra.mxu0 0.0
    %328 = vmatprep.subr.mxu0 0.0
    %329 = vmatpush2.msra.mxu0 0.0
    %330 = vmatprep.subr.mxu0 0.0
    %331 = vmatpush2.msra.mxu0 0.0
    %332 = vmatprep.subr.mxu0 0.0
    %333 = vmatpush2.msra.mxu0 0.0
    %334 = vmatprep.subr.mxu0 0.0
    %335 = vmatpush2.msra.mxu0 0.0
    %336 = vmatprep.subr.mxu0 0.0
    %337 = vmatpush2.msra.mxu0 0.0
    %338 = vmatprep.subr.mxu0 0.0
    %339 = vmatpush2.msra.mxu0 0.0
    %340 = vmatprep.subr.mxu0 0.0
    %341 = vmatpush2.msra.mxu0 0.0
    %342 = vmatprep.subr.mxu0 0.0
    %343 = vmatpush2.msra.mxu0 0.0
    %344 = vmatprep.subr.mxu0 0.0
    %345 = vmatpush2.msra.mxu0 0.0
    %346 = vmatprep.subr.mxu0 0.0
    %347 = vmatpush2.msra.mxu0 0.0
    %348 = vmatprep.subr.mxu0 0.0
    %349 = vmatpush2.msra.mxu0 0.0
    %350 = vmatprep.subr.mxu0 0.0
    %351 = vmatpush2.msra.mxu0 0.0
    %352 = vmatprep.subr.mxu0 0.0
    %353 = vmatpush2.msra.mxu0 0.0
    %354 = vmatprep.subr.mxu0 0.0
    %355 = vmatpush2.msra.mxu0 0.0
    %356 = vmatprep.mubr.f32.mxu0 0.0
    %357 = vmatmul.mubr.f32.gmra.mxu0 %v290
    %v358 = vpop.f32.mrf.mxu0
    %v359 = vadd.f32 0.0, %v358
    %v360 = vpop.f32.mrf.mxu0
    %361 = vdwg.mxu0
    %v362 = vadd.f32 %v288, %v359
    %v363 = vtanh.pop %v362
    %s364 = scalar_lea.vmem [#allocation3], 32
    %v365 = vld [vmem:[%s364] sm:$0xff]
    %v367 = vsel %vm57, %v363, 0
    %369 = vmatprep.subr.mxu0 0.0
    %370 = vmatpush1.msra.mxu0 0.0
    %371 = vmatprep.subr.mxu0 0.0
    %372 = vmatpush1.msra.mxu0 0.0
    %373 = vmatprep.subr.mxu0 0.0
    %374 = vmatpush1.msra.mxu0 0.0
    %375 = vmatprep.subr.mxu0 0.0
    %376 = vmatpush1.msra.mxu0 0.0
    %377 = vmatprep.subr.mxu0 0.0
    %378 = vmatpush1.msra.mxu0 0.0
    %379 = vmatprep.subr.mxu0 0.0
    %380 = vmatpush1.msra.mxu0 0.0
    %381 = vmatprep.subr.mxu0 0.0
    %382 = vmatpush1.msra.mxu0 0.0
    %383 = vmatprep.subr.mxu0 0.0
    %384 = vmatpush1.msra.mxu0 0.0
    %385 = vmatprep.subr.mxu0 0.0
    %386 = vmatpush1.msra.mxu0 0.0
    %387 = vmatprep.subr.mxu0 0.0
    %388 = vmatpush1.msra.mxu0 0.0
    %389 = vmatprep.subr.mxu0 0.0
    %390 = vmatpush1.msra.mxu0 0.0
    %391 = vmatprep.subr.mxu0 0.0
    %392 = vmatpush1.msra.mxu0 0.0
    %393 = vmatprep.subr.mxu0 0.0
    %394 = vmatpush1.msra.mxu0 %v54
    %395 = vmatprep.subr.mxu0 0.0
    %396 = vmatpush1.msra.mxu0 %v53
    %397 = vmatprep.subr.mxu0 0.0
    %398 = vmatpush1.msra.mxu0 %v52
    %399 = vmatprep.subr.mxu0 0.0
    %400 = vmatpush1.msra.mxu0 %v51
    %401 = vmatprep.subr.mxu0 0.0
    %402 = vmatpush2.msra.mxu0 0.0
    %403 = vmatprep.subr.mxu0 0.0
    %404 = vmatpush2.msra.mxu0 0.0
    %405 = vmatprep.subr.mxu0 0.0
    %406 = vmatpush2.msra.mxu0 0.0
    %407 = vmatprep.subr.mxu0 0.0
    %408 = vmatpush2.msra.mxu0 0.0
    %409 = vmatprep.subr.mxu0 0.0
    %410 = vmatpush2.msra.mxu0 0.0
    %411 = vmatprep.subr.mxu0 0.0
    %412 = vmatpush2.msra.mxu0 0.0
    %413 = vmatprep.subr.mxu0 0.0
    %414 = vmatpush2.msra.mxu0 0.0
    %415 = vmatprep.subr.mxu0 0.0
    %416 = vmatpush2.msra.mxu0 0.0
    %417 = vmatprep.subr.mxu0 0.0
    %418 = vmatpush2.msra.mxu0 0.0
    %419 = vmatprep.subr.mxu0 0.0
    %420 = vmatpush2.msra.mxu0 0.0
    %421 = vmatprep.subr.mxu0 0.0
    %422 = vmatpush2.msra.mxu0 0.0
    %423 = vmatprep.subr.mxu0 0.0
    %424 = vmatpush2.msra.mxu0 0.0
    %425 = vmatprep.subr.mxu0 0.0
    %426 = vmatpush2.msra.mxu0 0.0
    %427 = vmatprep.subr.mxu0 0.0
    %428 = vmatpush2.msra.mxu0 0.0
    %429 = vmatprep.subr.mxu0 0.0
    %430 = vmatpush2.msra.mxu0 0.0
    %431 = vmatprep.subr.mxu0 0.0
    %432 = vmatpush2.msra.mxu0 0.0
    %433 = vmatprep.mubr.f32.mxu0 0.0
    %434 = vmatmul.mubr.f32.gmra.mxu0 %v367
    %v435 = vpop.f32.mrf.mxu0
    %v436 = vadd.f32 0.0, %v435
    %v437 = vpop.f32.mrf.mxu0
    %438 = vdwg.mxu0
    %v439 = vadd.f32 %v365, %v436
    %v440 = vtanh.pop %v439
    %s441 = scalar_lea.vmem [#allocation3], 40
    %v442 = vld [vmem:[%s441] sm:$0xff]
    %v444 = vsel %vm57, %v440, 0
    %446 = vmatprep.subr.mxu0 0.0
    %447 = vmatpush1.msra.mxu0 0.0
    %448 = vmatprep.subr.mxu0 0.0
    %449 = vmatpush1.msra.mxu0 0.0
    %450 = vmatprep.subr.mxu0 0.0
    %451 = vmatpush1.msra.mxu0 0.0
    %452 = vmatprep.subr.mxu0 0.0
    %453 = vmatpush1.msra.mxu0 0.0
    %454 = vmatprep.subr.mxu0 0.0
    %455 = vmatpush1.msra.mxu0 0.0
    %456 = vmatprep.subr.mxu0 0.0
    %457 = vmatpush1.msra.mxu0 0.0
    %458 = vmatprep.subr.mxu0 0.0
    %459 = vmatpush1.msra.mxu0 0.0
    %460 = vmatprep.subr.mxu0 0.0
    %461 = vmatpush1.msra.mxu0 0.0
    %462 = vmatprep.subr.mxu0 0.0
    %463 = vmatpush1.msra.mxu0 0.0
    %464 = vmatprep.subr.mxu0 0.0
    %465 = vmatpush1.msra.mxu0 0.0
    %466 = vmatprep.subr.mxu0 0.0
    %467 = vmatpush1.msra.mxu0 0.0
    %468 = vmatprep.subr.mxu0 0.0
    %469 = vmatpush1.msra.mxu0 0.0
    %470 = vmatprep.subr.mxu0 0.0
    %471 = vmatpush1.msra.mxu0 %v54
    %472 = vmatprep.subr.mxu0 0.0
    %473 = vmatpush1.msra.mxu0 %v53
    %474 = vmatprep.subr.mxu0 0.0
    %475 = vmatpush1.msra.mxu0 %v52
    %476 = vmatprep.subr.mxu0 0.0
    %477 = vmatpush1.msra.mxu0 %v51
    %478 = vmatprep.subr.mxu0 0.0
    %479 = vmatpush2.msra.mxu0 0.0
    %480 = vmatprep.subr.mxu0 0.0
    %481 = vmatpush2.msra.mxu0 0.0
    %482 = vmatprep.subr.mxu0 0.0
    %483 = vmatpush2.msra.mxu0 0.0
    %484 = vmatprep.subr.mxu0 0.0
    %485 = vmatpush2.msra.mxu0 0.0
    %486 = vmatprep.subr.mxu0 0.0
    %487 = vmatpush2.msra.mxu0 0.0
    %488 = vmatprep.subr.mxu0 0.0
    %489 = vmatpush2.msra.mxu0 0.0
    %490 = vmatprep.subr.mxu0 0.0
    %491 = vmatpush2.msra.mxu0 0.0
    %492 = vmatprep.subr.mxu0 0.0
    %493 = vmatpush2.msra.mxu0 0.0
    %494 = vmatprep.subr.mxu0 0.0
    %495 = vmatpush2.msra.mxu0 0.0
    %496 = vmatprep.subr.mxu0 0.0
    %497 = vmatpush2.msra.mxu0 0.0
    %498 = vmatprep.subr.mxu0 0.0
    %499 = vmatpush2.msra.mxu0 0.0
    %500 = vmatprep.subr.mxu0 0.0
    %501 = vmatpush2.msra.mxu0 0.0
    %502 = vmatprep.subr.mxu0 0.0
    %503 = vmatpush2.msra.mxu0 0.0
    %504 = vmatprep.subr.mxu0 0.0
    %505 = vmatpush2.msra.mxu0 0.0
    %506 = vmatprep.subr.mxu0 0.0
    %507 = vmatpush2.msra.mxu0 0.0
    %508 = vmatprep.subr.mxu0 0.0
    %509 = vmatpush2.msra.mxu0 0.0
    %510 = vmatprep.mubr.f32.mxu0 0.0
    %511 = vmatmul.mubr.f32.gmra.mxu0 %v444
    %v512 = vpop.f32.mrf.mxu0
    %v513 = vadd.f32 0.0, %v512
    %v514 = vpop.f32.mrf.mxu0
    %515 = vdwg.mxu0
    %v516 = vadd.f32 %v442, %v513
    %v517 = vtanh.pop %v516
    %s518 = scalar_lea.vmem [#allocation3], 48
    %v519 = vld [vmem:[%s518] sm:$0xff]
    %v521 = vsel %vm57, %v517, 0
    %523 = vmatprep.subr.mxu0 0.0
    %524 = vmatpush1.msra.mxu0 0.0
    %525 = vmatprep.subr.mxu0 0.0
    %526 = vmatpush1.msra.mxu0 0.0
    %527 = vmatprep.subr.mxu0 0.0
    %528 = vmatpush1.msra.mxu0 0.0
    %529 = vmatprep.subr.mxu0 0.0
    %530 = vmatpush1.msra.mxu0 0.0
    %531 = vmatprep.subr.mxu0 0.0
    %532 = vmatpush1.msra.mxu0 0.0
    %533 = vmatprep.subr.mxu0 0.0
    %534 = vmatpush1.msra.mxu0 0.0
    %535 = vmatprep.subr.mxu0 0.0
    %536 = vmatpush1.msra.mxu0 0.0
    %537 = vmatprep.subr.mxu0 0.0
    %538 = vmatpush1.msra.mxu0 0.0
    %539 = vmatprep.subr.mxu0 0.0
    %540 = vmatpush1.msra.mxu0 0.0
    %541 = vmatprep.subr.mxu0 0.0
    %542 = vmatpush1.msra.mxu0 0.0
    %543 = vmatprep.subr.mxu0 0.0
    %544 = vmatpush1.msra.mxu0 0.0
    %545 = vmatprep.subr.mxu0 0.0
    %546 = vmatpush1.msra.mxu0 0.0
    %547 = vmatprep.subr.mxu0 0.0
    %548 = vmatpush1.msra.mxu0 %v54
    %549 = vmatprep.subr.mxu0 0.0
    %550 = vmatpush1.msra.mxu0 %v53
    %551 = vmatprep.subr.mxu0 0.0
    %552 = vmatpush1.msra.mxu0 %v52
    %553 = vmatprep.subr.mxu0 0.0
    %554 = vmatpush1.msra.mxu0 %v51
    %555 = vmatprep.subr.mxu0 0.0
    %556 = vmatpush2.msra.mxu0 0.0
    %557 = vmatprep.subr.mxu0 0.0
    %558 = vmatpush2.msra.mxu0 0.0
    %559 = vmatprep.subr.mxu0 0.0
    %560 = vmatpush2.msra.mxu0 0.0
    %561 = vmatprep.subr.mxu0 0.0
    %562 = vmatpush2.msra.mxu0 0.0
    %563 = vmatprep.subr.mxu0 0.0
    %564 = vmatpush2.msra.mxu0 0.0
    %565 = vmatprep.subr.mxu0 0.0
    %566 = vmatpush2.msra.mxu0 0.0
    %567 = vmatprep.subr.mxu0 0.0
    %568 = vmatpush2.msra.mxu0 0.0
    %569 = vmatprep.subr.mxu0 0.0
    %570 = vmatpush2.msra.mxu0 0.0
    %571 = vmatprep.subr.mxu0 0.0
    %572 = vmatpush2.msra.mxu0 0.0
    %573 = vmatprep.subr.mxu0 0.0
    %574 = vmatpush2.msra.mxu0 0.0
    %575 = vmatprep.subr.mxu0 0.0
    %576 = vmatpush2.msra.mxu0 0.0
    %577 = vmatprep.subr.mxu0 0.0
    %578 = vmatpush2.msra.mxu0 0.0
    %579 = vmatprep.subr.mxu0 0.0
    %580 = vmatpush2.msra.mxu0 0.0
    %581 = vmatprep.subr.mxu0 0.0
    %582 = vmatpush2.msra.mxu0 0.0
    %583 = vmatprep.subr.mxu0 0.0
    %584 = vmatpush2.msra.mxu0 0.0
    %585 = vmatprep.subr.mxu0 0.0
    %586 = vmatpush2.msra.mxu0 0.0
    %587 = vmatprep.mubr.f32.mxu0 0.0
    %588 = vmatmul.mubr.f32.gmra.mxu0 %v521
    %v589 = vpop.f32.mrf.mxu0
    %v590 = vadd.f32 0.0, %v589
    %v591 = vpop.f32.mrf.mxu0
    %592 = vdwg.mxu0
    %v593 = vadd.f32 %v519, %v590
    %v594 = vtanh.pop %v593
    %s595 = scalar_lea.vmem [#allocation3], 56
    %v596 = vld [vmem:[%s595] sm:$0xff]
    %v598 = vsel %vm57, %v594, 0
    %600 = vmatprep.subr.mxu0 0.0
    %601 = vmatpush1.msra.mxu0 0.0
    %602 = vmatprep.subr.mxu0 0.0
    %603 = vmatpush1.msra.mxu0 0.0
    %604 = vmatprep.subr.mxu0 0.0
    %605 = vmatpush1.msra.mxu0 0.0
    %606 = vmatprep.subr.mxu0 0.0
    %607 = vmatpush1.msra.mxu0 0.0
    %608 = vmatprep.subr.mxu0 0.0
    %609 = vmatpush1.msra.mxu0 0.0
    %610 = vmatprep.subr.mxu0 0.0
    %611 = vmatpush1.msra.mxu0 0.0
    %612 = vmatprep.subr.mxu0 0.0
    %613 = vmatpush1.msra.mxu0 0.0
    %614 = vmatprep.subr.mxu0 0.0
    %615 = vmatpush1.msra.mxu0 0.0
    %616 = vmatprep.subr.mxu0 0.0
    %617 = vmatpush1.msra.mxu0 0.0
    %618 = vmatprep.subr.mxu0 0.0
    %619 = vmatpush1.msra.mxu0 0.0
    %620 = vmatprep.subr.mxu0 0.0
    %621 = vmatpush1.msra.mxu0 0.0
    %622 = vmatprep.subr.mxu0 0.0
    %623 = vmatpush1.msra.mxu0 0.0
    %624 = vmatprep.subr.mxu0 0.0
    %625 = vmatpush1.msra.mxu0 %v54
    %626 = vmatprep.subr.mxu0 0.0
    %627 = vmatpush1.msra.mxu0 %v53
    %628 = vmatprep.subr.mxu0 0.0
    %629 = vmatpush1.msra.mxu0 %v52
    %630 = vmatprep.subr.mxu0 0.0
    %631 = vmatpush1.msra.mxu0 %v51
    %632 = vmatprep.subr.mxu0 0.0
    %633 = vmatpush2.msra.mxu0 0.0
    %634 = vmatprep.subr.mxu0 0.0
    %635 = vmatpush2.msra.mxu0 0.0
    %636 = vmatprep.subr.mxu0 0.0
    %637 = vmatpush2.msra.mxu0 0.0
    %638 = vmatprep.subr.mxu0 0.0
    %639 = vmatpush2.msra.mxu0 0.0
    %640 = vmatprep.subr.mxu0 0.0
    %641 = vmatpush2.msra.mxu0 0.0
    %642 = vmatprep.subr.mxu0 0.0
    %643 = vmatpush2.msra.mxu0 0.0
    %644 = vmatprep.subr.mxu0 0.0
    %645 = vmatpush2.msra.mxu0 0.0
    %646 = vmatprep.subr.mxu0 0.0
    %647 = vmatpush2.msra.mxu0 0.0
    %648 = vmatprep.subr.mxu0 0.0
    %649 = vmatpush2.msra.mxu0 0.0
    %650 = vmatprep.subr.mxu0 0.0
    %651 = vmatpush2.msra.mxu0 0.0
    %652 = vmatprep.subr.mxu0 0.0
    %653 = vmatpush2.msra.mxu0 0.0
    %654 = vmatprep.subr.mxu0 0.0
    %655 = vmatpush2.msra.mxu0 0.0
    %656 = vmatprep.subr.mxu0 0.0
    %657 = vmatpush2.msra.mxu0 0.0
    %658 = vmatprep.subr.mxu0 0.0
    %659 = vmatpush2.msra.mxu0 0.0
    %660 = vmatprep.subr.mxu0 0.0
    %661 = vmatpush2.msra.mxu0 0.0
    %662 = vmatprep.subr.mxu0 0.0
    %663 = vmatpush2.msra.mxu0 0.0
    %664 = vmatprep.mubr.f32.mxu0 0.0
    %665 = vmatmul.mubr.f32.gmra.mxu0 %v598
    %v666 = vpop.f32.mrf.mxu0
    %v667 = vadd.f32 0.0, %v666
    %v668 = vpop.f32.mrf.mxu0
    %669 = vdwg.mxu0
    %v670 = vadd.f32 %v596, %v667
    %v671 = vtanh.pop %v670
    %672 = vst.msk [vmem:[#allocation8] sm:$0xff] %vm57, %v671
    %v673 = vld [vmem:[%s3] sm:$0xff]
    %v674 = vld [vmem:[%s3 + $0x8] sm:$0xff]
    %v675 = vld [vmem:[%s3 + $0x10] sm:$0xff]
    %v676 = vld [vmem:[%s3 + $0x18] sm:$0xff]
    %v677 = vld [vmem:[#allocation2] sm:$0x1]
    %v679 = vlaneseq
    %v680 = vshrl.u32 %v679, 7
    %v681 = vsub.s32 0, %v680
    %v682 = vrot.slane %v677, %v681
    %v685 = vsel %vm57, %v671, 0
    %687 = vmatprep.subr.mxu0 0.0
    %688 = vmatpush1.msra.mxu0 0.0
    %689 = vmatprep.subr.mxu0 0.0
    %690 = vmatpush1.msra.mxu0 0.0
    %691 = vmatprep.subr.mxu0 0.0
    %692 = vmatpush1.msra.mxu0 0.0
    %693 = vmatprep.subr.mxu0 0.0
    %694 = vmatpush1.msra.mxu0 0.0
    %695 = vmatprep.subr.mxu0 0.0
    %696 = vmatpush1.msra.mxu0 0.0
    %697 = vmatprep.subr.mxu0 0.0
    %698 = vmatpush1.msra.mxu0 0.0
    %699 = vmatprep.subr.mxu0 0.0
    %700 = vmatpush1.msra.mxu0 0.0
    %701 = vmatprep.subr.mxu0 0.0
    %702 = vmatpush1.msra.mxu0 0.0
    %703 = vmatprep.subr.mxu0 0.0
    %704 = vmatpush1.msra.mxu0 0.0
    %705 = vmatprep.subr.mxu0 0.0
    %706 = vmatpush1.msra.mxu0 0.0
    %707 = vmatprep.subr.mxu0 0.0
    %708 = vmatpush1.msra.mxu0 0.0
    %709 = vmatprep.subr.mxu0 0.0
    %710 = vmatpush1.msra.mxu0 0.0
    %711 = vmatprep.subr.mxu0 0.0
    %712 = vmatpush1.msra.mxu0 %v676
    %713 = vmatprep.subr.mxu0 0.0
    %714 = vmatpush1.msra.mxu0 %v675
    %715 = vmatprep.subr.mxu0 0.0
    %716 = vmatpush1.msra.mxu0 %v674
    %717 = vmatprep.subr.mxu0 0.0
    %718 = vmatpush1.msra.mxu0 %v673
    %719 = vmatprep.subr.mxu0 0.0
    %720 = vmatpush2.msra.mxu0 0.0
    %721 = vmatprep.subr.mxu0 0.0
    %722 = vmatpush2.msra.mxu0 0.0
    %723 = vmatprep.subr.mxu0 0.0
    %724 = vmatpush2.msra.mxu0 0.0
    %725 = vmatprep.subr.mxu0 0.0
    %726 = vmatpush2.msra.mxu0 0.0
    %727 = vmatprep.subr.mxu0 0.0
    %728 = vmatpush2.msra.mxu0 0.0
    %729 = vmatprep.subr.mxu0 0.0
    %730 = vmatpush2.msra.mxu0 0.0
    %731 = vmatprep.subr.mxu0 0.0
    %732 = vmatpush2.msra.mxu0 0.0
    %733 = vmatprep.subr.mxu0 0.0
    %734 = vmatpush2.msra.mxu0 0.0
    %735 = vmatprep.subr.mxu0 0.0
    %736 = vmatpush2.msra.mxu0 0.0
    %737 = vmatprep.subr.mxu0 0.0
    %738 = vmatpush2.msra.mxu0 0.0
    %739 = vmatprep.subr.mxu0 0.0
    %740 = vmatpush2.msra.mxu0 0.0
    %741 = vmatprep.subr.mxu0 0.0
    %742 = vmatpush2.msra.mxu0 0.0
    %743 = vmatprep.subr.mxu0 0.0
    %744 = vmatpush2.msra.mxu0 0.0
    %745 = vmatprep.subr.mxu0 0.0
    %746 = vmatpush2.msra.mxu0 0.0
    %747 = vmatprep.subr.mxu0 0.0
    %748 = vmatpush2.msra.mxu0 0.0
    %749 = vmatprep.subr.mxu0 0.0
    %750 = vmatpush2.msra.mxu0 0.0
    %751 = vmatprep.mubr.f32.mxu0 0.0
    %752 = vmatmul.mubr.f32.gmra.mxu0 %v685
    %v753 = vpop.f32.mrf.mxu0
    %v754 = vadd.f32 %v682, %v753
    %v755 = vpop.f32.mrf.mxu0
    %756 = vdwg.mxu0
    %vm757 = vcmask 7168
    %758 = vst.msk [vmem:[%s5] sm:$0xff] %vm757, %v754
    // Predicated region
    $region30: #{tpu_custom_call.1} parent=1 // pred_check
      _
    $region31: #{tpu_custom_call.1} parent=1 // pred_check_branch
      %760 = sbr.rel (0) target = $region33
    $region32: #{tpu_custom_call.1} parent=1 // pred_region
      _
    $region33: #{tpu_custom_call.1} parent=1 // pred_fallthru
      _
    // Predicated region
    $region34: #{tpu_custom_call.1} parent=1 // pred_check
      _
    $region35: #{tpu_custom_call.1} parent=1 // pred_check_branch
      %762 = sbr.rel (0) target = $region37
    $region36: #{tpu_custom_call.1} parent=1 // pred_region
      %s764 = ssub.s32 128, 128
      %765 = vsyncadd [#allocation5], %s764
      %s767 = sshll.u32 [#allocation8], 4
      %s768 = int_to_ptr.vmem [resolvable:$true] %s767
      %770 = dma.vmem_to_hbm [thread:$0]  %s768, 128, %s6, [#allocation5]
    $region37: #{tpu_custom_call.1} parent=1 // pred_fallthru
      _
    // Predicated region
    $region38: #{tpu_custom_call.1} parent=1 // pred_check
      _
    $region39: #{tpu_custom_call.1} parent=1 // pred_check_branch
      %772 = sbr.rel (0) target = $region41
    $region40: #{tpu_custom_call.1} parent=1 // pred_region
      _
    $region41: #{tpu_custom_call.1} parent=1 // pred_fallthru
      _
    // Predicated region
    $region42: #{tpu_custom_call.1} parent=1 // pred_check
      _
    $region43: #{tpu_custom_call.1} parent=1 // pred_check_branch
      %774 = sbr.rel (0) target = $region45
    $region44: #{tpu_custom_call.1} parent=1 // pred_region
      %775 = dma.done [#allocation5], 128
    $region45: #{tpu_custom_call.1} parent=1 // pred_fallthru
      _
    %776 = vsyncpa [#allocation4], 1
    %777 = vsyncpa [#allocation7], 1
    %778 = vsyncpa [#allocation5], 1

</llo_original>
